<compile_context>
chip_gen: v6e
topology: v6e:2x2x1
jax: 0.10.0
libtpu: 0.0.40
codegen_flags: <defaults>
</compile_context>

<pallas_src>
import functools

import jax
import jax.numpy as jnp
from jax import lax
from jax.experimental import pallas as pl
from jax.experimental.pallas import tpu as pltpu

_HIGHEST = lax.Precision.HIGHEST


# ----------------------------------------------------------------------------
# Stem: Conv1d(k=3, pad=1, no bias) + folded BatchNorm1d as a single matmul.
# ----------------------------------------------------------------------------
def _stem_kernel(cols_ref, w_ref, scale_ref, shift_ref, o_ref):
    # cols_ref:  (K*C_in, B*L)   im2col'd padded input
    # w_ref:     (C_out, K*C_in) conv weight, tap-major columns
    # scale_ref: (C_out, 1)      folded BN scale
    # shift_ref: (C_out, 1)      folded BN shift
    # o_ref:     (C_out, B*L)
    acc = jnp.dot(w_ref[...], cols_ref[...],
                  preferred_element_type=jnp.float32, precision=_HIGHEST)
    o_ref[...] = (acc * scale_ref[...] + shift_ref[...]).astype(o_ref.dtype)


def stem_forward(x, conv_w, bn_scale, bn_shift):
    """x: (B, C_in, L) f32; conv_w: (C_out, C_in, K); bn_*: (C_out,)."""
    B, C_in, L = x.shape
    C_out, _, K = conv_w.shape
    x_pad = jnp.pad(x, ((0, 0), (0, 0), (1, 1)))            # pad=1 on length
    # im2col: cols[k*C_in + c, b*L + l] = x_pad[b, c, l + k]
    cols = jnp.stack([x_pad[:, :, k:k + L] for k in range(K)], axis=0)  # (K,B,C_in,L)
    cols = cols.transpose(0, 2, 1, 3).reshape(K * C_in, B * L)
    # w2[o, k*C_in + c] = conv_w[o, c, k]
    w2 = conv_w.transpose(0, 2, 1).reshape(C_out, K * C_in)
    scale = bn_scale.reshape(C_out, 1)
    shift = bn_shift.reshape(C_out, 1)
    out2d = pl.pallas_call(
        _stem_kernel,
        out_shape=jax.ShapeDtypeStruct((C_out, B * L), jnp.float32),
        grid=(1,),
        in_specs=[
            pl.BlockSpec((K * C_in, B * L), lambda i: (0, 0)),
            pl.BlockSpec((C_out, K * C_in), lambda i: (0, 0)),
            pl.BlockSpec((C_out, 1), lambda i: (0, 0)),
            pl.BlockSpec((C_out, 1), lambda i: (0, 0)),
        ],
        out_specs=pl.BlockSpec((C_out, B * L), lambda i: (0, 0)),
    )(cols, w2, scale, shift)
    # Lane-dense (C_out, B*L) slab -> NCL layout in the wrapper.
    return out2d.reshape(C_out, B, L).transpose(1, 0, 2)


def stem_reference(x, conv_w, bn_scale, bn_shift):
    B, C_in, L = x.shape
    C_out, _, K = conv_w.shape
    xp = jnp.pad(x, ((0, 0), (0, 0), (1, 1)))
    out = jnp.zeros((B, C_out, L), jnp.float32)
    for k in range(K):
        out = out + jnp.einsum("oc,bcl->bol", conv_w[:, :, k], xp[:, :, k:k + L],
                               precision=_HIGHEST)
    return out * bn_scale[None, :, None] + bn_shift[None, :, None]


# ----------------------------------------------------------------------------
# 3-layer LSTM (PyTorch gate order i, f, g, o), whole sequence in one kernel.
# Weights are pre-fused in the wrapper: w_ref[l] = [W_ih^T ; W_hh^T]  (2H, 4H).
# ----------------------------------------------------------------------------
def _lstm_kernel(x_ref, w_ref, b_ref, out_ref, hn_ref, cn_ref, *, T, B):
    # x_ref/out_ref: (T*B, H)  time-major, flattened
    # w_ref:         (L, 2H, 4H)
    # b_ref:         (L, 1, 4H)   b_ih + b_hh, gates concatenated
    # hn_ref/cn_ref: (L, B, H)
    num_layers = w_ref.shape[0]
    H = w_ref.shape[1] // 2

    out_ref[...] = x_ref[...]                     # out_ref doubles as seq buffer
    for layer in range(num_layers):               # static unroll over layers
        w_l = w_ref[layer]                        # (2H, 4H)
        wih = w_l[:H, :]                          # (H, 4H), already transposed
        whh = w_l[H:, :]                          # (H, 4H)
        b = b_ref[layer]                          # (1, 4H)

        # Hoisted input projection + bias for the whole sequence: one matmul.
        proj = jnp.dot(out_ref[...], wih,
                       preferred_element_type=jnp.float32,
                       precision=_HIGHEST) + b    # (T*B, 4H)

        h = jnp.zeros((B, H), jnp.float32)
        c = jnp.zeros((B, H), jnp.float32)
        for t in range(T):                        # static unroll: LLO visibility
            gates = proj[t * B:(t + 1) * B, :] + jnp.dot(
                h, whh, preferred_element_type=jnp.float32,
                precision=_HIGHEST)               # (B, 4H) fused gate pre-acts
            sig = jax.nn.sigmoid(gates)
            i_g = sig[:, 0:H]
            f_g = sig[:, H:2 * H]
            o_g = sig[:, 3 * H:4 * H]
            g_g = jnp.tanh(gates[:, 2 * H:3 * H])
            c = f_g * c + i_g * g_g
            h = o_g * jnp.tanh(c)
            out_ref[t * B:(t + 1) * B, :] = h     # layer output feeds next layer
        hn_ref[layer] = h
        cn_ref[layer] = c


def lstm_forward(x, w_ih, w_hh, b_ih, b_hh):
    """x: (T, B, H); w_ih/w_hh: (L, 4H, H); b_ih/b_hh: (L, 4H). PyTorch layout."""
    T, B, H = x.shape
    num_layers = w_ih.shape[0]
    # Pre-transpose + stack so the kernel never transposes in the hot loop:
    #   w_stack[l, :H, :]  = W_ih[l]^T   (H, 4H)
    #   w_stack[l, H:, :]  = W_hh[l]^T   (H, 4H)
    w_stack = jnp.concatenate(
        [jnp.transpose(w_ih, (0, 2, 1)), jnp.transpose(w_hh, (0, 2, 1))], axis=1)
    b_cat = (b_ih + b_hh).reshape(num_layers, 1, 4 * H)
    x2d = x.reshape(T * B, H)

    kernel = functools.partial(_lstm_kernel, T=T, B=B)
    out2d, hn, cn = pl.pallas_call(
        kernel,
        out_shape=(jax.ShapeDtypeStruct((T * B, H), jnp.float32),
                   jax.ShapeDtypeStruct((num_layers, B, H), jnp.float32),
                   jax.ShapeDtypeStruct((num_layers, B, H), jnp.float32)),
        grid=(1,),
        in_specs=[
            pl.BlockSpec((T * B, H), lambda i: (0, 0)),
            pl.BlockSpec((num_layers, 2 * H, 4 * H), lambda i: (0, 0, 0)),
            pl.BlockSpec((num_layers, 1, 4 * H), lambda i: (0, 0, 0)),
        ],
        out_specs=(pl.BlockSpec((T * B, H), lambda i: (0, 0)),
                   pl.BlockSpec((num_layers, B, H), lambda i: (0, 0, 0)),
                   pl.BlockSpec((num_layers, B, H), lambda i: (0, 0, 0))),
    )(x2d, w_stack, b_cat)
    return out2d.reshape(T, B, H), hn, cn


def lstm_reference(x, w_ih, w_hh, b_ih, b_hh):
    T, B, H = x.shape
    num_layers = w_ih.shape[0]
    seq = x
    hs, cs = [], []
    for l in range(num_layers):
        h = jnp.zeros((B, H), jnp.float32)
        c = jnp.zeros((B, H), jnp.float32)
        outs = []
        for t in range(T):
            g = (jnp.dot(seq[t], w_ih[l].T, precision=_HIGHEST)
                 + jnp.dot(h, w_hh[l].T, precision=_HIGHEST)
                 + b_ih[l] + b_hh[l])
            i_g = jax.nn.sigmoid(g[:, 0:H])
            f_g = jax.nn.sigmoid(g[:, H:2 * H])
            g_g = jnp.tanh(g[:, 2 * H:3 * H])
            o_g = jax.nn.sigmoid(g[:, 3 * H:4 * H])
            c = f_g * c + i_g * g_g
            h = o_g * jnp.tanh(c)
            outs.append(h)
        seq = jnp.stack(outs, axis=0)
        hs.append(h)
        cs.append(c)
    return seq, jnp.stack(hs), jnp.stack(cs)


# ----------------------------------------------------------------------------
if __name__ == "__main__":
    key = jax.random.PRNGKey(0)

    # BreadNetwork hyper-params (small, consistent with __init__):
    #   C_in=4, C=4, stem_multiplier=4 -> C_stem = 16; rnn_seq_len=8, 3 LSTM layers
    C_in, C, stem_multiplier = 4, 4, 4
    C_stem = stem_multiplier * C
    B, L = 2, 16
    num_layers, H, T = 3, 8, 8   # LSTM: input_size = hidden_size = rnn_seq_len = 8

    ks = jax.random.split(key, 11)
    x = jax.random.normal(ks[0], (B, C_in, L), jnp.float32)

    # Stem parameters (deterministic synthetic init).
    conv_w = 0.2 * jax.random.normal(ks[1], (C_stem, C_in, 3), jnp.float32)
    gamma = 1.0 + 0.1 * jax.random.normal(ks[2], (C_stem,), jnp.float32)
    beta = 0.1 * jax.random.normal(ks[3], (C_stem,), jnp.float32)
    run_mean = 0.05 * jax.random.normal(ks[4], (C_stem,), jnp.float32)
    run_var = 1.0 + 0.1 * jax.random.uniform(ks[5], (C_stem,), jnp.float32)
    eps = 1e-5
    bn_scale = gamma / jnp.sqrt(run_var + eps)
    bn_shift = beta - run_mean * bn_scale

    # LSTM parameters (PyTorch layout: (L, 4H, H) weights, (L, 4H) biases,
    # gate order i, f, g, o).
    x_lstm = jax.random.normal(ks[6], (T, B, H), jnp.float32)
    w_ih = 0.3 * jax.random.normal(ks[7], (num_layers, 4 * H, H), jnp.float32)
    w_hh = 0.3 * jax.random.normal(ks[8], (num_layers, 4 * H, H), jnp.float32)
    b_ih = 0.1 * jax.random.normal(ks[9], (num_layers, 4 * H), jnp.float32)
    b_hh = 0.1 * jax.random.normal(ks[10], (num_layers, 4 * H), jnp.float32)

    # Stem Conv1d + BN kernel (single fused matmul).
    stem_out = jax.block_until_ready(stem_forward(x, conv_w, bn_scale, bn_shift))
    stem_ref = stem_reference(x, conv_w, bn_scale, bn_shift)
    assert stem_out.shape == (B, C_stem, L)
    assert jnp.allclose(stem_out, stem_ref, atol=1e-4, rtol=1e-4)

    # 3-layer LSTM kernel (fused gates, hoisted input projection).
    out, hn, cn = jax.block_until_ready(
        lstm_forward(x_lstm, w_ih, w_hh, b_ih, b_hh))
    ref_out, ref_hn, ref_cn = lstm_reference(x_lstm, w_ih, w_hh, b_ih, b_hh)
    assert out.shape == (T, B, H)
    assert hn.shape == (num_layers, B, H) and cn.shape == (num_layers, B, H)
    assert jnp.allclose(out, ref_out, atol=1e-4, rtol=1e-4)
    assert jnp.allclose(hn, ref_hn, atol=1e-4, rtol=1e-4)
    assert jnp.allclose(cn, ref_cn, atol=1e-4, rtol=1e-4)

    print("KERNEL_OK")
</pallas_src>

<mosaic_0001>
module attributes {stable_mosaic.version = 11 : i64} {
  func.func @_stem_kernel(%arg0: i32, %arg1: memref<12x32xf32, #tpu.memory_space<vmem>>, %arg2: memref<16x12xf32, #tpu.memory_space<vmem>>, %arg3: memref<16x1xf32, #tpu.memory_space<vmem>>, %arg4: memref<16x1xf32, #tpu.memory_space<vmem>>, %arg5: memref<16x32xf32, #tpu.memory_space<vmem>>) attributes {dimension_semantics = [#tpu.dimension_semantics<arbitrary>], iteration_bounds = array<i64: 1>, scalar_prefetch = 0 : i64, scratch_operands = 0 : i64, tpu.core_type = #tpu.core_type<tc>, window_params = [{pipeline_mode = #tpu.pipeline_mode<synchronous>, transform_indices = @transform_0, window_bounds = array<i64: 12, 32>}, {pipeline_mode = #tpu.pipeline_mode<synchronous>, transform_indices = @transform_1, window_bounds = array<i64: 16, 12>}, {pipeline_mode = #tpu.pipeline_mode<synchronous>, transform_indices = @transform_2, window_bounds = array<i64: 16, 1>}, {pipeline_mode = #tpu.pipeline_mode<synchronous>, transform_indices = @transform_3, window_bounds = array<i64: 16, 1>}, {pipeline_mode = #tpu.pipeline_mode<synchronous>, transform_indices = @transform_4, window_bounds = array<i64: 16, 32>}]} {
    %c0 = arith.constant 0 : index
    %c0_0 = arith.constant 0 : index
    %0 = vector.load %arg2[%c0, %c0_0] : memref<16x12xf32, #tpu.memory_space<vmem>>, vector<16x12xf32>
    %c0_1 = arith.constant 0 : index
    %c0_2 = arith.constant 0 : index
    %1 = vector.load %arg1[%c0_1, %c0_2] : memref<12x32xf32, #tpu.memory_space<vmem>>, vector<12x32xf32>
    %cst = arith.constant dense<0.000000e+00> : vector<16x32xf32>
    %2 = tpu.matmul %0, %1, %cst {dimension_numbers = #tpu.dot_dimension_numbers<[1], [0], [0], [1], [0, 0, 1, 1], [], []>, precision = #tpu.contract_precision<fp32>} : vector<16x12xf32>, vector<12x32xf32>, vector<16x32xf32> -> vector<16x32xf32>
    %c0_3 = arith.constant 0 : index
    %c0_4 = arith.constant 0 : index
    %3 = vector.load %arg3[%c0_3, %c0_4] : memref<16x1xf32, #tpu.memory_space<vmem>>, vector<16x1xf32>
    %4 = vector.broadcast %3 : vector<16x1xf32> to vector<16x32xf32>
    %5 = arith.mulf %2, %4 : vector<16x32xf32>
    %c0_5 = arith.constant 0 : index
    %c0_6 = arith.constant 0 : index
    %6 = vector.load %arg4[%c0_5, %c0_6] : memref<16x1xf32, #tpu.memory_space<vmem>>, vector<16x1xf32>
    %7 = vector.broadcast %6 : vector<16x1xf32> to vector<16x32xf32>
    %8 = arith.addf %5, %7 : vector<16x32xf32>
    %c0_7 = arith.constant 0 : index
    %c0_8 = arith.constant 0 : index
    %9 = vector.load %arg5[%c0_7, %c0_8] : memref<16x32xf32, #tpu.memory_space<vmem>>, vector<16x32xf32>
    tpu.vector_store %arg5[%c0_7, %c0_8], %8 {strides = array<i32>} : memref<16x32xf32, #tpu.memory_space<vmem>>, vector<16x32xf32>,
    return
  }
  func.func @transform_0(%arg0: i32) -> (i32, i32) {
    %c0_i32 = arith.constant 0 : i32
    %c0_i32_0 = arith.constant 0 : i32
    %c0_i32_1 = arith.constant 0 : i32
    return %c0_i32, %c0_i32_0 : i32, i32
  }
  func.func @transform_1(%arg0: i32) -> (i32, i32) {
    %c0_i32 = arith.constant 0 : i32
    %c0_i32_0 = arith.constant 0 : i32
    %c0_i32_1 = arith.constant 0 : i32
    return %c0_i32, %c0_i32_0 : i32, i32
  }
  func.func @transform_2(%arg0: i32) -> (i32, i32) {
    %c0_i32 = arith.constant 0 : i32
    %c0_i32_0 = arith.constant 0 : i32
    %c0_i32_1 = arith.constant 0 : i32
    return %c0_i32, %c0_i32_0 : i32, i32
  }
  func.func @transform_3(%arg0: i32) -> (i32, i32) {
    %c0_i32 = arith.constant 0 : i32
    %c0_i32_0 = arith.constant 0 : i32
    %c0_i32_1 = arith.constant 0 : i32
    return %c0_i32, %c0_i32_0 : i32, i32
  }
  func.func @transform_4(%arg0: i32) -> (i32, i32) {
    %c0_i32 = arith.constant 0 : i32
    %c0_i32_0 = arith.constant 0 : i32
    %c0_i32_1 = arith.constant 0 : i32
    return %c0_i32, %c0_i32_0 : i32, i32
  }
}

</mosaic_0001>

<llo_original>
// kernel: tpu_custom_call.1
$region0: #{tpu_custom_call.1}
  #allocation0 [shape = 'u32[]', space=smem, size = 0x4, offset = 0x4, fixed_abs, tag = 'smem constant byte address 0x4 - core index']
  #allocation1 [shape = 'u32[144,128]{1,0:T(1,128)}', space=vmem, size = 0x12000, scoped, tag = 'internal scratch']
  %s0 = inlined_call_operand.vmem [shape: f32[12,32], index: 0, kind: input, shape index: {}]
  %s1 = inlined_call_operand.vmem [shape: f32[16,12], index: 1, kind: input, shape index: {}]
  %s2 = inlined_call_operand.vmem [shape: f32[16,1], index: 2, kind: input, shape index: {}]
  %s3 = inlined_call_operand.vmem [shape: f32[16,1], index: 3, kind: input, shape index: {}]
  %s4 = inlined_call_operand.hbm [shape: f32[16,32], index: 4, kind: output, shape index: {}]
  %s5 = sld [smem:[#allocation0]]
  $region26: #{tpu_custom_call.1} parent=0
    _
  %s7 = ssub.s32 1, %s5
  %s8 = scalar_select 0, %s7, %s5
  $region1: #{tpu_custom_call.1} parent=0
    #allocation2 [shape = 'u8[8192]{0}', space=vmem, size = 0x2000, scoped, tag = 'output window, operand 0, single buffered']
    #allocation3 [shape = 's32[1]{0}', space=sflag, size = 0x4, scoped, tag = 'scoped memory for tpu_custom_call.1']
    %9 = vsyncpa [#allocation3], 0
    // Predicated region
    $region2: #{tpu_custom_call.1} parent=1 // pred_check
      _
    $region3: #{tpu_custom_call.1} parent=1 // pred_check_branch
      %11 = sbr.rel (0) target = $region5
    $region4: #{tpu_custom_call.1} parent=1 // pred_region
      _
    $region5: #{tpu_custom_call.1} parent=1 // pred_fallthru
      _
    // Predicated region
    $region6: #{tpu_custom_call.1} parent=1 // pred_check
      _
    $region7: #{tpu_custom_call.1} parent=1 // pred_check_branch
      %13 = sbr.rel (0) target = $region9
    $region8: #{tpu_custom_call.1} parent=1 // pred_region
      _
    $region9: #{tpu_custom_call.1} parent=1 // pred_fallthru
      _
    // Predicated region
    $region10: #{tpu_custom_call.1} parent=1 // pred_check
      _
    $region11: #{tpu_custom_call.1} parent=1 // pred_check_branch
      %15 = sbr.rel (0) target = $region13
    $region12: #{tpu_custom_call.1} parent=1 // pred_region
      _
    $region13: #{tpu_custom_call.1} parent=1 // pred_fallthru
      _
    // Predicated region
    $region14: #{tpu_custom_call.1} parent=1 // pred_check
      _
    $region15: #{tpu_custom_call.1} parent=1 // pred_check_branch
      %17 = sbr.rel (0) target = $region17
    $region16: #{tpu_custom_call.1} parent=1 // pred_region
      _
    $region17: #{tpu_custom_call.1} parent=1 // pred_fallthru
      _
    %v18 = vld [vmem:[%s1] sm:$0xff]
    %v19 = vld [vmem:[%s1 + $0x8] sm:$0xff]
    %v20 = vld [vmem:[%s0] sm:$0xff]
    %v21 = vld [vmem:[%s0 + $0x8] sm:$0xf]
    %vm22 = vcmask 97280
    %v24 = vsel %vm22, %v18, 0
    %v27 = vsel %vm22, %v19, 0
    %vm29 = vcmask 1043456
    %v31 = vsel %vm29, %v21, 0
    %33 = vmatprep.subr.mxu0 0.0
    %34 = vmatpush1.msra.mxu0 0.0
    %35 = vmatprep.subr.mxu0 0.0
    %36 = vmatpush1.msra.mxu0 0.0
    %37 = vmatprep.subr.mxu0 0.0
    %38 = vmatpush1.msra.mxu0 0.0
    %39 = vmatprep.subr.mxu0 0.0
    %40 = vmatpush1.msra.mxu0 0.0
    %41 = vmatprep.subr.mxu0 0.0
    %42 = vmatpush1.msra.mxu0 0.0
    %43 = vmatprep.subr.mxu0 0.0
    %44 = vmatpush1.msra.mxu0 0.0
    %45 = vmatprep.subr.mxu0 0.0
    %46 = vmatpush1.msra.mxu0 0.0
    %47 = vmatprep.subr.mxu0 0.0
    %48 = vmatpush1.msra.mxu0 0.0
    %49 = vmatprep.subr.mxu0 0.0
    %50 = vmatpush1.msra.mxu0 0.0
    %51 = vmatprep.subr.mxu0 0.0
    %52 = vmatpush1.msra.mxu0 0.0
    %53 = vmatprep.subr.mxu0 0.0
    %54 = vmatpush1.msra.mxu0 0.0
    %55 = vmatprep.subr.mxu0 0.0
    %56 = vmatpush1.msra.mxu0 0.0
    %57 = vmatprep.subr.mxu0 0.0
    %58 = vmatpush1.msra.mxu0 0.0
    %59 = vmatprep.subr.mxu0 0.0
    %60 = vmatpush1.msra.mxu0 0.0
    %61 = vmatprep.subr.mxu0 0.0
    %v62 = vand.u32 %v31, 4294901760
    %63 = vmatpush1.msra.mxu0 %v62
    %64 = vmatprep.subr.mxu0 0.0
    %v65 = vand.u32 %v20, 4294901760
    %66 = vmatpush1.msra.mxu0 %v65
    %67 = vmatprep.subr.mxu0 0.0
    %68 = vmatpush2.msra.mxu0 0.0
    %69 = vmatprep.subr.mxu0 0.0
    %70 = vmatpush2.msra.mxu0 0.0
    %71 = vmatprep.subr.mxu0 0.0
    %72 = vmatpush2.msra.mxu0 0.0
    %73 = vmatprep.subr.mxu0 0.0
    %74 = vmatpush2.msra.mxu0 0.0
    %75 = vmatprep.subr.mxu0 0.0
    %76 = vmatpush2.msra.mxu0 0.0
    %77 = vmatprep.subr.mxu0 0.0
    %78 = vmatpush2.msra.mxu0 0.0
    %79 = vmatprep.subr.mxu0 0.0
    %80 = vmatpush2.msra.mxu0 0.0
    %81 = vmatprep.subr.mxu0 0.0
    %82 = vmatpush2.msra.mxu0 0.0
    %83 = vmatprep.subr.mxu0 0.0
    %84 = vmatpush2.msra.mxu0 0.0
    %85 = vmatprep.subr.mxu0 0.0
    %86 = vmatpush2.msra.mxu0 0.0
    %87 = vmatprep.subr.mxu0 0.0
    %88 = vmatpush2.msra.mxu0 0.0
    %89 = vmatprep.subr.mxu0 0.0
    %90 = vmatpush2.msra.mxu0 0.0
    %91 = vmatprep.subr.mxu0 0.0
    %92 = vmatpush2.msra.mxu0 0.0
    %93 = vmatprep.subr.mxu0 0.0
    %94 = vmatpush2.msra.mxu0 0.0
    %95 = vmatprep.subr.mxu0 0.0
    %96 = vmatpush2.msra.mxu0 0.0
    %97 = vmatprep.subr.mxu0 0.0
    %98 = vmatpush2.msra.mxu0 0.0
    %99 = vmatprep.mubr.f32.mxu0 0.0
    %v100 = vand.u32 %v24, 4294901760
    %v101 = vsub.f32 %v24, %v100
    %v102 = vand.u32 %v101, 4294901760
    %v103 = vsub.f32 %v101, %v102
    %v104 = vand.u32 %v103, 4294901760
    %105 = vmatmul.mubr.f32.gmra.mxu0 %v104
    %v106 = vpop.f32.mrf.mxu0
    %v107 = vadd.f32 0.0, %v106
    %v108 = vpop.f32.mrf.mxu0
    %109 = vmatprep.mubr.f32.mxu0 0.0
    %v110 = vand.u32 %v27, 4294901760
    %v111 = vsub.f32 %v27, %v110
    %v112 = vand.u32 %v111, 4294901760
    %v113 = vsub.f32 %v111, %v112
    %v114 = vand.u32 %v113, 4294901760
    %115 = vmatmul.mubr.f32.gmra.mxu0 %v114
    %v116 = vpop.f32.mrf.mxu0
    %v117 = vadd.f32 0.0, %v116
    %v118 = vpop.f32.mrf.mxu0
    %119 = vdwg.mxu0
    %120 = vmatprep.subr.mxu0 0.0
    %121 = vmatpush1.msra.mxu0 0.0
    %122 = vmatprep.subr.mxu0 0.0
    %123 = vmatpush1.msra.mxu0 0.0
    %124 = vmatprep.subr.mxu0 0.0
    %125 = vmatpush1.msra.mxu0 0.0
    %126 = vmatprep.subr.mxu0 0.0
    %127 = vmatpush1.msra.mxu0 0.0
    %128 = vmatprep.subr.mxu0 0.0
    %129 = vmatpush1.msra.mxu0 0.0
    %130 = vmatprep.subr.mxu0 0.0
    %131 = vmatpush1.msra.mxu0 0.0
    %132 = vmatprep.subr.mxu0 0.0
    %133 = vmatpush1.msra.mxu0 0.0
    %134 = vmatprep.subr.mxu0 0.0
    %135 = vmatpush1.msra.mxu0 0.0
    %136 = vmatprep.subr.mxu0 0.0
    %137 = vmatpush1.msra.mxu0 0.0
    %138 = vmatprep.subr.mxu0 0.0
    %139 = vmatpush1.msra.mxu0 0.0
    %140 = vmatprep.subr.mxu0 0.0
    %141 = vmatpush1.msra.mxu0 0.0
    %142 = vmatprep.subr.mxu0 0.0
    %143 = vmatpush1.msra.mxu0 0.0
    %144 = vmatprep.subr.mxu0 0.0
    %145 = vmatpush1.msra.mxu0 0.0
    %146 = vmatprep.subr.mxu0 0.0
    %147 = vmatpush1.msra.mxu0 0.0
    %148 = vmatprep.subr.mxu0 0.0
    %v149 = vand.u32 %v31, 4294901760
    %v150 = vsub.f32 %v31, %v149
    %v151 = vand.u32 %v150, 4294901760
    %v152 = vsub.f32 %v150, %v151
    %v153 = vand.u32 %v152, 4294901760
    %154 = vmatpush1.msra.mxu0 %v153
    %155 = vmatprep.subr.mxu0 0.0
    %v156 = vand.u32 %v20, 4294901760
    %v157 = vsub.f32 %v20, %v156
    %v158 = vand.u32 %v157, 4294901760
    %v159 = vsub.f32 %v157, %v158
    %v160 = vand.u32 %v159, 4294901760
    %161 = vmatpush1.msra.mxu0 %v160
    %162 = vmatprep.subr.mxu0 0.0
    %163 = vmatpush2.msra.mxu0 0.0
    %164 = vmatprep.subr.mxu0 0.0
    %165 = vmatpush2.msra.mxu0 0.0
    %166 = vmatprep.subr.mxu0 0.0
    %167 = vmatpush2.msra.mxu0 0.0
    %168 = vmatprep.subr.mxu0 0.0
    %169 = vmatpush2.msra.mxu0 0.0
    %170 = vmatprep.subr.mxu0 0.0
    %171 = vmatpush2.msra.mxu0 0.0
    %172 = vmatprep.subr.mxu0 0.0
    %173 = vmatpush2.msra.mxu0 0.0
    %174 = vmatprep.subr.mxu0 0.0
    %175 = vmatpush2.msra.mxu0 0.0
    %176 = vmatprep.subr.mxu0 0.0
    %177 = vmatpush2.msra.mxu0 0.0
    %178 = vmatprep.subr.mxu0 0.0
    %179 = vmatpush2.msra.mxu0 0.0
    %180 = vmatprep.subr.mxu0 0.0
    %181 = vmatpush2.msra.mxu0 0.0
    %182 = vmatprep.subr.mxu0 0.0
    %183 = vmatpush2.msra.mxu0 0.0
    %184 = vmatprep.subr.mxu0 0.0
    %185 = vmatpush2.msra.mxu0 0.0
    %186 = vmatprep.subr.mxu0 0.0
    %187 = vmatpush2.msra.mxu0 0.0
    %188 = vmatprep.subr.mxu0 0.0
    %189 = vmatpush2.msra.mxu0 0.0
    %190 = vmatprep.subr.mxu0 0.0
    %191 = vmatpush2.msra.mxu0 0.0
    %192 = vmatprep.subr.mxu0 0.0
    %193 = vmatpush2.msra.mxu0 0.0
    %194 = vmatprep.mubr.f32.mxu0 0.0
    %v195 = vand.u32 %v24, 4294901760
    %196 = vmatmul.mubr.f32.gmra.mxu0 %v195
    %v197 = vpop.f32.mrf.mxu0
    %v198 = vadd.f32 %v107, %v197
    %v199 = vpop.f32.mrf.mxu0
    %200 = vmatprep.mubr.f32.mxu0 0.0
    %v201 = vand.u32 %v27, 4294901760
    %202 = vmatmul.mubr.f32.gmra.mxu0 %v201
    %v203 = vpop.f32.mrf.mxu0
    %v204 = vadd.f32 %v117, %v203
    %v205 = vpop.f32.mrf.mxu0
    %206 = vdwg.mxu0
    %207 = vmatprep.subr.mxu0 0.0
    %208 = vmatpush1.msra.mxu0 0.0
    %209 = vmatprep.subr.mxu0 0.0
    %210 = vmatpush1.msra.mxu0 0.0
    %211 = vmatprep.subr.mxu0 0.0
    %212 = vmatpush1.msra.mxu0 0.0
    %213 = vmatprep.subr.mxu0 0.0
    %214 = vmatpush1.msra.mxu0 0.0
    %215 = vmatprep.subr.mxu0 0.0
    %216 = vmatpush1.msra.mxu0 0.0
    %217 = vmatprep.subr.mxu0 0.0
    %218 = vmatpush1.msra.mxu0 0.0
    %219 = vmatprep.subr.mxu0 0.0
    %220 = vmatpush1.msra.mxu0 0.0
    %221 = vmatprep.subr.mxu0 0.0
    %222 = vmatpush1.msra.mxu0 0.0
    %223 = vmatprep.subr.mxu0 0.0
    %224 = vmatpush1.msra.mxu0 0.0
    %225 = vmatprep.subr.mxu0 0.0
    %226 = vmatpush1.msra.mxu0 0.0
    %227 = vmatprep.subr.mxu0 0.0
    %228 = vmatpush1.msra.mxu0 0.0
    %229 = vmatprep.subr.mxu0 0.0
    %230 = vmatpush1.msra.mxu0 0.0
    %231 = vmatprep.subr.mxu0 0.0
    %232 = vmatpush1.msra.mxu0 0.0
    %233 = vmatprep.subr.mxu0 0.0
    %234 = vmatpush1.msra.mxu0 0.0
    %235 = vmatprep.subr.mxu0 0.0
    %v236 = vand.u32 %v31, 4294901760
    %v237 = vsub.f32 %v31, %v236
    %238 = vmatpush1.msra.mxu0 %v237
    %239 = vmatprep.subr.mxu0 0.0
    %v240 = vand.u32 %v20, 4294901760
    %v241 = vsub.f32 %v20, %v240
    %242 = vmatpush1.msra.mxu0 %v241
    %243 = vmatprep.subr.mxu0 0.0
    %244 = vmatpush2.msra.mxu0 0.0
    %245 = vmatprep.subr.mxu0 0.0
    %246 = vmatpush2.msra.mxu0 0.0
    %247 = vmatprep.subr.mxu0 0.0
    %248 = vmatpush2.msra.mxu0 0.0
    %249 = vmatprep.subr.mxu0 0.0
    %250 = vmatpush2.msra.mxu0 0.0
    %251 = vmatprep.subr.mxu0 0.0
    %252 = vmatpush2.msra.mxu0 0.0
    %253 = vmatprep.subr.mxu0 0.0
    %254 = vmatpush2.msra.mxu0 0.0
    %255 = vmatprep.subr.mxu0 0.0
    %256 = vmatpush2.msra.mxu0 0.0
    %257 = vmatprep.subr.mxu0 0.0
    %258 = vmatpush2.msra.mxu0 0.0
    %259 = vmatprep.subr.mxu0 0.0
    %260 = vmatpush2.msra.mxu0 0.0
    %261 = vmatprep.subr.mxu0 0.0
    %262 = vmatpush2.msra.mxu0 0.0
    %263 = vmatprep.subr.mxu0 0.0
    %264 = vmatpush2.msra.mxu0 0.0
    %265 = vmatprep.subr.mxu0 0.0
    %266 = vmatpush2.msra.mxu0 0.0
    %267 = vmatprep.subr.mxu0 0.0
    %268 = vmatpush2.msra.mxu0 0.0
    %269 = vmatprep.subr.mxu0 0.0
    %270 = vmatpush2.msra.mxu0 0.0
    %271 = vmatprep.subr.mxu0 0.0
    %272 = vmatpush2.msra.mxu0 0.0
    %273 = vmatprep.subr.mxu0 0.0
    %274 = vmatpush2.msra.mxu0 0.0
    %275 = vmatprep.mubr.f32.mxu0 0.0
    %v276 = vand.u32 %v24, 4294901760
    %v277 = vsub.f32 %v24, %v276
    %278 = vmatmul.mubr.f32.gmra.mxu0 %v277
    %v279 = vpop.f32.mrf.mxu0
    %v280 = vadd.f32 %v198, %v279
    %v281 = vpop.f32.mrf.mxu0
    %282 = vmatprep.mubr.f32.mxu0 0.0
    %v283 = vand.u32 %v27, 4294901760
    %v284 = vsub.f32 %v27, %v283
    %285 = vmatmul.mubr.f32.gmra.mxu0 %v284
    %v286 = vpop.f32.mrf.mxu0
    %v287 = vadd.f32 %v204, %v286
    %v288 = vpop.f32.mrf.mxu0
    %289 = vdwg.mxu0
    %290 = vmatprep.subr.mxu0 0.0
    %291 = vmatpush1.msra.mxu0 0.0
    %292 = vmatprep.subr.mxu0 0.0
    %293 = vmatpush1.msra.mxu0 0.0
    %294 = vmatprep.subr.mxu0 0.0
    %295 = vmatpush1.msra.mxu0 0.0
    %296 = vmatprep.subr.mxu0 0.0
    %297 = vmatpush1.msra.mxu0 0.0
    %298 = vmatprep.subr.mxu0 0.0
    %299 = vmatpush1.msra.mxu0 0.0
    %300 = vmatprep.subr.mxu0 0.0
    %301 = vmatpush1.msra.mxu0 0.0
    %302 = vmatprep.subr.mxu0 0.0
    %303 = vmatpush1.msra.mxu0 0.0
    %304 = vmatprep.subr.mxu0 0.0
    %305 = vmatpush1.msra.mxu0 0.0
    %306 = vmatprep.subr.mxu0 0.0
    %307 = vmatpush1.msra.mxu0 0.0
    %308 = vmatprep.subr.mxu0 0.0
    %309 = vmatpush1.msra.mxu0 0.0
    %310 = vmatprep.subr.mxu0 0.0
    %311 = vmatpush1.msra.mxu0 0.0
    %312 = vmatprep.subr.mxu0 0.0
    %313 = vmatpush1.msra.mxu0 0.0
    %314 = vmatprep.subr.mxu0 0.0
    %315 = vmatpush1.msra.mxu0 0.0
    %316 = vmatprep.subr.mxu0 0.0
    %317 = vmatpush1.msra.mxu0 0.0
    %318 = vmatprep.subr.mxu0 0.0
    %v319 = vand.u32 %v31, 4294901760
    %320 = vmatpush1.msra.mxu0 %v319
    %321 = vmatprep.subr.mxu0 0.0
    %v322 = vand.u32 %v20, 4294901760
    %323 = vmatpush1.msra.mxu0 %v322
    %324 = vmatprep.subr.mxu0 0.0
    %325 = vmatpush2.msra.mxu0 0.0
    %326 = vmatprep.subr.mxu0 0.0
    %327 = vmatpush2.msra.mxu0 0.0
    %328 = vmatprep.subr.mxu0 0.0
    %329 = vmatpush2.msra.mxu0 0.0
    %330 = vmatprep.subr.mxu0 0.0
    %331 = vmatpush2.msra.mxu0 0.0
    %332 = vmatprep.subr.mxu0 0.0
    %333 = vmatpush2.msra.mxu0 0.0
    %334 = vmatprep.subr.mxu0 0.0
    %335 = vmatpush2.msra.mxu0 0.0
    %336 = vmatprep.subr.mxu0 0.0
    %337 = vmatpush2.msra.mxu0 0.0
    %338 = vmatprep.subr.mxu0 0.0
    %339 = vmatpush2.msra.mxu0 0.0
    %340 = vmatprep.subr.mxu0 0.0
    %341 = vmatpush2.msra.mxu0 0.0
    %342 = vmatprep.subr.mxu0 0.0
    %343 = vmatpush2.msra.mxu0 0.0
    %344 = vmatprep.subr.mxu0 0.0
    %345 = vmatpush2.msra.mxu0 0.0
    %346 = vmatprep.subr.mxu0 0.0
    %347 = vmatpush2.msra.mxu0 0.0
    %348 = vmatprep.subr.mxu0 0.0
    %349 = vmatpush2.msra.mxu0 0.0
    %350 = vmatprep.subr.mxu0 0.0
    %351 = vmatpush2.msra.mxu0 0.0
    %352 = vmatprep.subr.mxu0 0.0
    %353 = vmatpush2.msra.mxu0 0.0
    %354 = vmatprep.subr.mxu0 0.0
    %355 = vmatpush2.msra.mxu0 0.0
    %356 = vmatprep.mubr.f32.mxu0 0.0
    %v357 = vand.u32 %v24, 4294901760
    %v358 = vsub.f32 %v24, %v357
    %v359 = vand.u32 %v358, 4294901760
    %360 = vmatmul.mubr.f32.gmra.mxu0 %v359
    %v361 = vpop.f32.mrf.mxu0
    %v362 = vadd.f32 %v280, %v361
    %v363 = vpop.f32.mrf.mxu0
    %364 = vmatprep.mubr.f32.mxu0 0.0
    %v365 = vand.u32 %v27, 4294901760
    %v366 = vsub.f32 %v27, %v365
    %v367 = vand.u32 %v366, 4294901760
    %368 = vmatmul.mubr.f32.gmra.mxu0 %v367
    %v369 = vpop.f32.mrf.mxu0
    %v370 = vadd.f32 %v287, %v369
    %v371 = vpop.f32.mrf.mxu0
    %372 = vdwg.mxu0
    %373 = vmatprep.subr.mxu0 0.0
    %374 = vmatpush1.msra.mxu0 0.0
    %375 = vmatprep.subr.mxu0 0.0
    %376 = vmatpush1.msra.mxu0 0.0
    %377 = vmatprep.subr.mxu0 0.0
    %378 = vmatpush1.msra.mxu0 0.0
    %379 = vmatprep.subr.mxu0 0.0
    %380 = vmatpush1.msra.mxu0 0.0
    %381 = vmatprep.subr.mxu0 0.0
    %382 = vmatpush1.msra.mxu0 0.0
    %383 = vmatprep.subr.mxu0 0.0
    %384 = vmatpush1.msra.mxu0 0.0
    %385 = vmatprep.subr.mxu0 0.0
    %386 = vmatpush1.msra.mxu0 0.0
    %387 = vmatprep.subr.mxu0 0.0
    %388 = vmatpush1.msra.mxu0 0.0
    %389 = vmatprep.subr.mxu0 0.0
    %390 = vmatpush1.msra.mxu0 0.0
    %391 = vmatprep.subr.mxu0 0.0
    %392 = vmatpush1.msra.mxu0 0.0
    %393 = vmatprep.subr.mxu0 0.0
    %394 = vmatpush1.msra.mxu0 0.0
    %395 = vmatprep.subr.mxu0 0.0
    %396 = vmatpush1.msra.mxu0 0.0
    %397 = vmatprep.subr.mxu0 0.0
    %398 = vmatpush1.msra.mxu0 0.0
    %399 = vmatprep.subr.mxu0 0.0
    %400 = vmatpush1.msra.mxu0 0.0
    %401 = vmatprep.subr.mxu0 0.0
    %v402 = vand.u32 %v31, 4294901760
    %v403 = vsub.f32 %v31, %v402
    %v404 = vand.u32 %v403, 4294901760
    %405 = vmatpush1.msra.mxu0 %v404
    %406 = vmatprep.subr.mxu0 0.0
    %v407 = vand.u32 %v20, 4294901760
    %v408 = vsub.f32 %v20, %v407
    %v409 = vand.u32 %v408, 4294901760
    %410 = vmatpush1.msra.mxu0 %v409
    %411 = vmatprep.subr.mxu0 0.0
    %412 = vmatpush2.msra.mxu0 0.0
    %413 = vmatprep.subr.mxu0 0.0
    %414 = vmatpush2.msra.mxu0 0.0
    %415 = vmatprep.subr.mxu0 0.0
    %416 = vmatpush2.msra.mxu0 0.0
    %417 = vmatprep.subr.mxu0 0.0
    %418 = vmatpush2.msra.mxu0 0.0
    %419 = vmatprep.subr.mxu0 0.0
    %420 = vmatpush2.msra.mxu0 0.0
    %421 = vmatprep.subr.mxu0 0.0
    %422 = vmatpush2.msra.mxu0 0.0
    %423 = vmatprep.subr.mxu0 0.0
    %424 = vmatpush2.msra.mxu0 0.0
    %425 = vmatprep.subr.mxu0 0.0
    %426 = vmatpush2.msra.mxu0 0.0
    %427 = vmatprep.subr.mxu0 0.0
    %428 = vmatpush2.msra.mxu0 0.0
    %429 = vmatprep.subr.mxu0 0.0
    %430 = vmatpush2.msra.mxu0 0.0
    %431 = vmatprep.subr.mxu0 0.0
    %432 = vmatpush2.msra.mxu0 0.0
    %433 = vmatprep.subr.mxu0 0.0
    %434 = vmatpush2.msra.mxu0 0.0
    %435 = vmatprep.subr.mxu0 0.0
    %436 = vmatpush2.msra.mxu0 0.0
    %437 = vmatprep.subr.mxu0 0.0
    %438 = vmatpush2.msra.mxu0 0.0
    %439 = vmatprep.subr.mxu0 0.0
    %440 = vmatpush2.msra.mxu0 0.0
    %441 = vmatprep.subr.mxu0 0.0
    %442 = vmatpush2.msra.mxu0 0.0
    %443 = vmatprep.mubr.f32.mxu0 0.0
    %v444 = vand.u32 %v24, 4294901760
    %445 = vmatmul.mubr.f32.gmra.mxu0 %v444
    %v446 = vpop.f32.mrf.mxu0
    %v447 = vadd.f32 %v362, %v446
    %v448 = vpop.f32.mrf.mxu0
    %449 = vmatprep.mubr.f32.mxu0 0.0
    %v450 = vand.u32 %v27, 4294901760
    %451 = vmatmul.mubr.f32.gmra.mxu0 %v450
    %v452 = vpop.f32.mrf.mxu0
    %v453 = vadd.f32 %v370, %v452
    %v454 = vpop.f32.mrf.mxu0
    %455 = vdwg.mxu0
    %456 = vmatprep.subr.mxu0 0.0
    %457 = vmatpush1.msra.mxu0 0.0
    %458 = vmatprep.subr.mxu0 0.0
    %459 = vmatpush1.msra.mxu0 0.0
    %460 = vmatprep.subr.mxu0 0.0
    %461 = vmatpush1.msra.mxu0 0.0
    %462 = vmatprep.subr.mxu0 0.0
    %463 = vmatpush1.msra.mxu0 0.0
    %464 = vmatprep.subr.mxu0 0.0
    %465 = vmatpush1.msra.mxu0 0.0
    %466 = vmatprep.subr.mxu0 0.0
    %467 = vmatpush1.msra.mxu0 0.0
    %468 = vmatprep.subr.mxu0 0.0
    %469 = vmatpush1.msra.mxu0 0.0
    %470 = vmatprep.subr.mxu0 0.0
    %471 = vmatpush1.msra.mxu0 0.0
    %472 = vmatprep.subr.mxu0 0.0
    %473 = vmatpush1.msra.mxu0 0.0
    %474 = vmatprep.subr.mxu0 0.0
    %475 = vmatpush1.msra.mxu0 0.0
    %476 = vmatprep.subr.mxu0 0.0
    %477 = vmatpush1.msra.mxu0 0.0
    %478 = vmatprep.subr.mxu0 0.0
    %479 = vmatpush1.msra.mxu0 0.0
    %480 = vmatprep.subr.mxu0 0.0
    %481 = vmatpush1.msra.mxu0 0.0
    %482 = vmatprep.subr.mxu0 0.0
    %483 = vmatpush1.msra.mxu0 0.0
    %484 = vmatprep.subr.mxu0 0.0
    %v485 = vand.u32 %v31, 4294901760
    %486 = vmatpush1.msra.mxu0 %v485
    %487 = vmatprep.subr.mxu0 0.0
    %v488 = vand.u32 %v20, 4294901760
    %489 = vmatpush1.msra.mxu0 %v488
    %490 = vmatprep.subr.mxu0 0.0
    %491 = vmatpush2.msra.mxu0 0.0
    %492 = vmatprep.subr.mxu0 0.0
    %493 = vmatpush2.msra.mxu0 0.0
    %494 = vmatprep.subr.mxu0 0.0
    %495 = vmatpush2.msra.mxu0 0.0
    %496 = vmatprep.subr.mxu0 0.0
    %497 = vmatpush2.msra.mxu0 0.0
    %498 = vmatprep.subr.mxu0 0.0
    %499 = vmatpush2.msra.mxu0 0.0
    %500 = vmatprep.subr.mxu0 0.0
    %501 = vmatpush2.msra.mxu0 0.0
    %502 = vmatprep.subr.mxu0 0.0
    %503 = vmatpush2.msra.mxu0 0.0
    %504 = vmatprep.subr.mxu0 0.0
    %505 = vmatpush2.msra.mxu0 0.0
    %506 = vmatprep.subr.mxu0 0.0
    %507 = vmatpush2.msra.mxu0 0.0
    %508 = vmatprep.subr.mxu0 0.0
    %509 = vmatpush2.msra.mxu0 0.0
    %510 = vmatprep.subr.mxu0 0.0
    %511 = vmatpush2.msra.mxu0 0.0
    %512 = vmatprep.subr.mxu0 0.0
    %513 = vmatpush2.msra.mxu0 0.0
    %514 = vmatprep.subr.mxu0 0.0
    %515 = vmatpush2.msra.mxu0 0.0
    %516 = vmatprep.subr.mxu0 0.0
    %517 = vmatpush2.msra.mxu0 0.0
    %518 = vmatprep.subr.mxu0 0.0
    %519 = vmatpush2.msra.mxu0 0.0
    %520 = vmatprep.subr.mxu0 0.0
    %521 = vmatpush2.msra.mxu0 0.0
    %522 = vmatprep.mubr.f32.mxu0 0.0
    %v523 = vand.u32 %v24, 4294901760
    %524 = vmatmul.mubr.f32.gmra.mxu0 %v523
    %v525 = vpop.f32.mrf.mxu0
    %v526 = vadd.f32 %v447, %v525
    %v527 = vpop.f32.mrf.mxu0
    %528 = vmatprep.mubr.f32.mxu0 0.0
    %v529 = vand.u32 %v27, 4294901760
    %530 = vmatmul.mubr.f32.gmra.mxu0 %v529
    %v531 = vpop.f32.mrf.mxu0
    %v532 = vadd.f32 %v453, %v531
    %v533 = vpop.f32.mrf.mxu0
    %534 = vdwg.mxu0
    %v535 = vld [vmem:[%s2] sm:$0xff]
    %v536 = vld [vmem:[%s2 + $0x8] sm:$0xff]
    %538 = vset.pattern.permute.xlu0 0
    %539 = vperm.xlu0 %538, %v535
    %v540 = vpop.permute.xlu0 %539
    %543 = vset.pattern.permute.xlu0 0
    %544 = vperm.xlu0 %543, %v536
    %v545 = vpop.permute.xlu0 %544
    %v547 = vmul.f32 %v526, %v540
    %v548 = vmul.f32 %v532, %v545
    %v549 = vld [vmem:[%s3] sm:$0xff]
    %v550 = vld [vmem:[%s3 + $0x8] sm:$0xff]
    %552 = vset.pattern.permute.xlu0 0
    %553 = vperm.xlu0 %552, %v549
    %v554 = vpop.permute.xlu0 %553
    %557 = vset.pattern.permute.xlu0 0
    %558 = vperm.xlu0 %557, %v550
    %v559 = vpop.permute.xlu0 %558
    %v561 = vadd.f32 %v547, %v554
    %v562 = vadd.f32 %v548, %v559
    %vm563 = vcmask 261120
    %564 = vst.msk [vmem:[#allocation2] sm:$0xff] %vm563, %v561
    %565 = vst.msk [vmem:[#allocation2 + $0x8] sm:$0xff] %vm563, %v562
    // Predicated region
    $region18: #{tpu_custom_call.1} parent=1 // pred_check
      _
    $region19: #{tpu_custom_call.1} parent=1 // pred_check_branch
      %567 = sbr.rel (0) target = $region21
    $region20: #{tpu_custom_call.1} parent=1 // pred_region
      %s569 = ssub.s32 256, 256
      %570 = vsyncadd [#allocation3], %s569
      %s571 = sshll.u32 [#allocation2], 4
      %s572 = int_to_ptr.vmem [resolvable:$true] %s571
      %577 = dma.vmem_to_hbm [thread:$0]  %s572, 256, %s4, [#allocation3], 128, 128, 8
    $region21: #{tpu_custom_call.1} parent=1 // pred_fallthru
      _
    // Predicated region
    $region22: #{tpu_custom_call.1} parent=1 // pred_check
      _
    $region23: #{tpu_custom_call.1} parent=1 // pred_check_branch
      %579 = sbr.rel (0) target = $region25
    $region24: #{tpu_custom_call.1} parent=1 // pred_region
      %580 = dma.done [#allocation3], 256
    $region25: #{tpu_custom_call.1} parent=1 // pred_fallthru
      _
    %581 = vsyncpa [#allocation3], 1

</llo_original>
